<compile_context>
chip_gen: v7x
topology: tpu7x:2x2x1
jax: 0.10.0
libtpu: 0.0.40
codegen_flags: <defaults>
</compile_context>

<pallas_src>
import jax
import jax.numpy as jnp
from jax.experimental import pallas as pl
from jax.experimental.pallas import tpu as pltpu


def _round_up(x, m):
    return ((x + m - 1) // m) * m


def _binary_linear_kernel(x_ref, wb_ref, wscale_ref, wbias_ref, bias_ref,
                          o_ref, acc_ref, xsum_ref):
    k = pl.program_id(2)

    @pl.when(k == 0)
    def _():
        acc_ref[...] = jnp.zeros_like(acc_ref)
        xsum_ref[...] = jnp.zeros_like(xsum_ref)

    x = x_ref[...]                                            # (tm, tk) f32
    # MXU matmul on bf16 operands (+/-1 weights are exact in bf16), f32 accumulation.
    acc_ref[...] += jnp.dot(x.astype(jnp.bfloat16), wb_ref[...],
                            preferred_element_type=jnp.float32)
    # Row-sum of x, accumulated in f32, for the factored wbias term.
    xsum_ref[...] += jnp.sum(x, axis=-1, keepdims=True)

    @pl.when(k == pl.num_programs(2) - 1)
    def _():
        # Apply the factored affine + bias exactly once, in f32, at the last K step.
        out = (acc_ref[...] * wscale_ref[...]
               + xsum_ref[...] * wbias_ref[...]
               + bias_ref[...])
        o_ref[...] = out.astype(o_ref.dtype)


def _row_param(p, n):
    p = jnp.asarray(p, jnp.float32).reshape(-1)
    return jnp.broadcast_to(p, (n,)).reshape(1, n)


def binary_linear_wscales(x, weight, wscale, wbias, bias, *, tm=256, tn=256, tk=512):
    """x: (..., K) float; weight: (N, K); wscale/wbias: (N, 1) (row pattern); bias: (N,) or None."""
    orig_shape = x.shape
    K = orig_shape[-1]
    N = weight.shape[0]
    x2d = x.reshape(-1, K).astype(jnp.float32)
    M = x2d.shape[0]

    if bias is None:
        bias = jnp.zeros((N,), jnp.float32)

    # Pre-binarize (sign, matching torch.sign: sign(0) == 0) and pre-transpose to (K, N).
    # +/-1 (and 0) are exact in bf16; keeps the MXU operand narrow and transpose-free.
    wb_t = jnp.sign(weight.astype(jnp.float32)).astype(jnp.bfloat16).T      # (K, N)

    # Shrink tiles for small problems while keeping (8, 128) alignment; these conservative
    # defaults (~2.5 MiB of double-buffered VMEM) fit comfortably within v7x's 64 MiB.
    tm = min(tm, _round_up(M, 8))
    tk = min(tk, _round_up(K, 128))
    tn = min(tn, _round_up(N, 128))

    Mp = _round_up(M, tm)
    Kp = _round_up(K, tk)
    Np = _round_up(N, tn)   # lane-dense output: Np is a multiple of 128

    x_p = jnp.pad(x2d, ((0, Mp - M), (0, Kp - K)))
    wb_p = jnp.pad(wb_t, ((0, Kp - K), (0, Np - N)))
    wscale_p = jnp.pad(_row_param(wscale, N), ((0, 0), (0, Np - N)))
    wbias_p = jnp.pad(_row_param(wbias, N), ((0, 0), (0, Np - N)))
    bias_p = jnp.pad(jnp.asarray(bias, jnp.float32).reshape(1, N), ((0, 0), (0, Np - N)))

    grid = (Mp // tm, Np // tn, Kp // tk)

    out = pl.pallas_call(
        _binary_linear_kernel,
        out_shape=jax.ShapeDtypeStruct((Mp, Np), jnp.float32),
        grid_spec=pltpu.PrefetchScalarGridSpec(
            num_scalar_prefetch=0,
            grid=grid,
            in_specs=[
                pl.BlockSpec((tm, tk), lambda i, j, k: (i, k)),   # x tile
                pl.BlockSpec((tk, tn), lambda i, j, k: (k, j)),   # binarized weight.T tile
                pl.BlockSpec((1, tn), lambda i, j, k: (0, j)),    # wscale (lane-major)
                pl.BlockSpec((1, tn), lambda i, j, k: (0, j)),    # wbias  (lane-major)
                pl.BlockSpec((1, tn), lambda i, j, k: (0, j)),    # bias   (lane-major)
            ],
            out_specs=pl.BlockSpec((tm, tn), lambda i, j, k: (i, j)),
            scratch_shapes=[
                pltpu.VMEM((tm, tn), jnp.float32),   # matmul accumulator
                pltpu.VMEM((tm, 1), jnp.float32),    # rowsum(x) accumulator
            ],
        ),
        compiler_params=pltpu.CompilerParams(
            dimension_semantics=("parallel", "parallel", "arbitrary")),
        cost_estimate=pl.CostEstimate(
            flops=2 * Mp * Np * Kp,
            transcendentals=0,
            bytes_accessed=(Mp * Kp * 4 + Kp * Np * 2 + 3 * Np * 4 + Mp * Np * 4)),
    )(x_p, wb_p, wscale_p, wbias_p, bias_p)

    return out[:M, :N].reshape(*orig_shape[:-1], N)


def init_params(key, out_features, in_features):
    """Mirror __init__ with scaling_pattern='row', init_method='xnor'."""
    kw, kb = jax.random.split(key)
    weight = jax.random.normal(kw, (out_features, in_features), dtype=jnp.float32)
    bias = jax.random.normal(kb, (out_features,), dtype=jnp.float32)
    mean = jnp.mean(weight, axis=-1, keepdims=True)                       # (N, 1) -> wbias
    scale = jnp.mean(jnp.abs(weight - mean), axis=-1, keepdims=True)      # (N, 1) -> wscale
    return weight, scale, mean, bias


if __name__ == "__main__":
    key = jax.random.PRNGKey(0)
    k_x, k_p = jax.random.split(key)

    batch, seq, in_features, out_features = 2, 8, 32, 16
    x = jax.random.normal(k_x, (batch, seq, in_features), dtype=jnp.float32)

    weight, wscale, wbias, bias = init_params(k_p, out_features, in_features)

    out = binary_linear_wscales(x, weight, wscale, wbias, bias)
    out = jax.block_until_ready(out)

    # Pure-JAX f32 reference of the module semantics.
    w_ref = wscale * jnp.sign(weight) + wbias
    ref = jnp.einsum("bsk,nk->bsn", x, w_ref) + bias

    assert out.shape == (batch, seq, out_features)
    # Tolerance relaxed vs. the f32 reference because x is rounded to bf16 for the MXU
    # (the +/-1 weights, wscale/wbias/bias and accumulation stay exact / f32).
    assert jnp.allclose(out, ref, atol=5e-2, rtol=5e-2), float(jnp.max(jnp.abs(out - ref)))

    print("KERNEL_OK")
</pallas_src>

<mosaic_0001>
module attributes {stable_mosaic.version = 11 : i64} {
  func.func @_binary_linear_kernel(%arg0: i32, %arg1: i32, %arg2: i32, %arg3: memref<16x128xf32, #tpu.memory_space<vmem>>, %arg4: memref<128x128xbf16, #tpu.memory_space<vmem>>, %arg5: memref<1x128xf32, #tpu.memory_space<vmem>>, %arg6: memref<1x128xf32, #tpu.memory_space<vmem>>, %arg7: memref<1x128xf32, #tpu.memory_space<vmem>>, %arg8: memref<16x128xf32, #tpu.memory_space<vmem>>, %arg9: memref<16x128xf32, #tpu.memory_space<vmem>>, %arg10: memref<16x1xf32, #tpu.memory_space<vmem>>) attributes {dimension_semantics = [#tpu.dimension_semantics<parallel>, #tpu.dimension_semantics<parallel>, #tpu.dimension_semantics<arbitrary>], iteration_bounds = array<i64: 1, 1, 1>, scalar_prefetch = 0 : i64, scratch_operands = 2 : i64, tpu.core_type = #tpu.core_type<tc>, window_params = [{transform_indices = @transform_0, window_bounds = array<i64: 16, 128>}, {transform_indices = @transform_1, window_bounds = array<i64: 128, 128>}, {transform_indices = @transform_2, window_bounds = array<i64: 1, 128>}, {transform_indices = @transform_3, window_bounds = array<i64: 1, 128>}, {transform_indices = @transform_4, window_bounds = array<i64: 1, 128>}, {transform_indices = @transform_5, window_bounds = array<i64: 16, 128>}]} {
    %c0_i32 = arith.constant 0 : i32
    %0 = arith.cmpi eq, %arg2, %c0_i32 : i32
    %1 = arith.extui %0 : i1 to i32
    %c0_i32_0 = arith.constant 0 : i32
    %2 = arith.cmpi ne, %1, %c0_i32_0 : i32
    scf.if %2 {
      %cst_15 = arith.constant 0.000000e+00 : f32
      %18 = vector.broadcast %cst_15 : f32 to vector<16x128xf32>
      %c0_16 = arith.constant 0 : index
      %c0_17 = arith.constant 0 : index
      %19 = vector.load %arg9[%c0_16, %c0_17] : memref<16x128xf32, #tpu.memory_space<vmem>>, vector<16x128xf32>
      tpu.vector_store %arg9[%c0_16, %c0_17], %18 {strides = array<i32>} : memref<16x128xf32, #tpu.memory_space<vmem>>, vector<16x128xf32>,
      %cst_18 = arith.constant 0.000000e+00 : f32
      %20 = vector.broadcast %cst_18 : f32 to vector<16x1xf32>
      %c0_19 = arith.constant 0 : index
      %c0_20 = arith.constant 0 : index
      %21 = vector.load %arg10[%c0_19, %c0_20] : memref<16x1xf32, #tpu.memory_space<vmem>>, vector<16x1xf32>
      tpu.vector_store %arg10[%c0_19, %c0_20], %20 {strides = array<i32>} : memref<16x1xf32, #tpu.memory_space<vmem>>, vector<16x1xf32>,
    } else {
    }
    %c0 = arith.constant 0 : index
    %c0_1 = arith.constant 0 : index
    %3 = vector.load %arg3[%c0, %c0_1] : memref<16x128xf32, #tpu.memory_space<vmem>>, vector<16x128xf32>
    %c0_2 = arith.constant 0 : index
    %c0_3 = arith.constant 0 : index
    %4 = vector.load %arg9[%c0_2, %c0_3] : memref<16x128xf32, #tpu.memory_space<vmem>>, vector<16x128xf32>
    %5 = arith.truncf %3 : vector<16x128xf32> to vector<16x128xbf16>
    %c0_4 = arith.constant 0 : index
    %c0_5 = arith.constant 0 : index
    %6 = vector.load %arg4[%c0_4, %c0_5] : memref<128x128xbf16, #tpu.memory_space<vmem>>, vector<128x128xbf16>
    %cst = arith.constant dense<0.000000e+00> : vector<16x128xf32>
    %7 = tpu.matmul %5, %6, %cst {dimension_numbers = #tpu.dot_dimension_numbers<[1], [0], [0], [1], [0, 0, 1, 1], [], []>} : vector<16x128xbf16>, vector<128x128xbf16>, vector<16x128xf32> -> vector<16x128xf32>
    %8 = arith.addf %4, %7 : vector<16x128xf32>
    %c0_6 = arith.constant 0 : index
    %c0_7 = arith.constant 0 : index
    %9 = vector.load %arg9[%c0_6, %c0_7] : memref<16x128xf32, #tpu.memory_space<vmem>>, vector<16x128xf32>
    tpu.vector_store %arg9[%c0_6, %c0_7], %8 {strides = array<i32>} : memref<16x128xf32, #tpu.memory_space<vmem>>, vector<16x128xf32>,
    %c0_8 = arith.constant 0 : index
    %c0_9 = arith.constant 0 : index
    %10 = vector.load %arg10[%c0_8, %c0_9] : memref<16x1xf32, #tpu.memory_space<vmem>>, vector<16x1xf32>
    %cst_10 = arith.constant dense<0.000000e+00> : vector<16xf32>
    %11 = vector.multi_reduction <add>, %3, %cst_10 [1] : vector<16x128xf32> to vector<16xf32>
    %12 = vector.shape_cast %11 : vector<16xf32> to vector<16x1xf32>
    %13 = arith.addf %10, %12 : vector<16x1xf32>
    %c0_11 = arith.constant 0 : index
    %c0_12 = arith.constant 0 : index
    %14 = vector.load %arg10[%c0_11, %c0_12] : memref<16x1xf32, #tpu.memory_space<vmem>>, vector<16x1xf32>
    tpu.vector_store %arg10[%c0_11, %c0_12], %13 {strides = array<i32>} : memref<16x1xf32, #tpu.memory_space<vmem>>, vector<16x1xf32>,
    %c0_i32_13 = arith.constant 0 : i32
    %15 = arith.cmpi eq, %arg2, %c0_i32_13 : i32
    %16 = arith.extui %15 : i1 to i32
    %c0_i32_14 = arith.constant 0 : i32
    %17 = arith.cmpi ne, %16, %c0_i32_14 : i32
    scf.if %17 {
      %c0_15 = arith.constant 0 : index
      %c0_16 = arith.constant 0 : index
      %18 = vector.load %arg9[%c0_15, %c0_16] : memref<16x128xf32, #tpu.memory_space<vmem>>, vector<16x128xf32>
      %c0_17 = arith.constant 0 : index
      %c0_18 = arith.constant 0 : index
      %19 = vector.load %arg5[%c0_17, %c0_18] : memref<1x128xf32, #tpu.memory_space<vmem>>, vector<1x128xf32>
      %20 = vector.broadcast %19 : vector<1x128xf32> to vector<16x128xf32>
      %21 = arith.mulf %18, %20 : vector<16x128xf32>
      %c0_19 = arith.constant 0 : index
      %c0_20 = arith.constant 0 : index
      %22 = vector.load %arg10[%c0_19, %c0_20] : memref<16x1xf32, #tpu.memory_space<vmem>>, vector<16x1xf32>
      %c0_21 = arith.constant 0 : index
      %c0_22 = arith.constant 0 : index
      %23 = vector.load %arg6[%c0_21, %c0_22] : memref<1x128xf32, #tpu.memory_space<vmem>>, vector<1x128xf32>
      %24 = vector.broadcast %22 : vector<16x1xf32> to vector<16x128xf32>
      %25 = vector.broadcast %23 : vector<1x128xf32> to vector<16x128xf32>
      %26 = arith.mulf %24, %25 : vector<16x128xf32>
      %27 = arith.addf %21, %26 : vector<16x128xf32>
      %c0_23 = arith.constant 0 : index
      %c0_24 = arith.constant 0 : index
      %28 = vector.load %arg7[%c0_23, %c0_24] : memref<1x128xf32, #tpu.memory_space<vmem>>, vector<1x128xf32>
      %29 = vector.broadcast %28 : vector<1x128xf32> to vector<16x128xf32>
      %30 = arith.addf %27, %29 : vector<16x128xf32>
      %c0_25 = arith.constant 0 : index
      %c0_26 = arith.constant 0 : index
      %31 = vector.load %arg8[%c0_25, %c0_26] : memref<16x128xf32, #tpu.memory_space<vmem>>, vector<16x128xf32>
      tpu.vector_store %arg8[%c0_25, %c0_26], %30 {strides = array<i32>} : memref<16x128xf32, #tpu.memory_space<vmem>>, vector<16x128xf32>,
    } else {
    }
    return
  }
  func.func @transform_0(%arg0: i32, %arg1: i32, %arg2: i32) -> (i32, i32) {
    %c0_i32 = arith.constant 0 : i32
    return %arg0, %arg2 : i32, i32
  }
  func.func @transform_1(%arg0: i32, %arg1: i32, %arg2: i32) -> (i32, i32) {
    %c0_i32 = arith.constant 0 : i32
    return %arg2, %arg1 : i32, i32
  }
  func.func @transform_2(%arg0: i32, %arg1: i32, %arg2: i32) -> (i32, i32) {
    %c0_i32 = arith.constant 0 : i32
    %c0_i32_0 = arith.constant 0 : i32
    return %c0_i32, %arg1 : i32, i32
  }
  func.func @transform_3(%arg0: i32, %arg1: i32, %arg2: i32) -> (i32, i32) {
    %c0_i32 = arith.constant 0 : i32
    %c0_i32_0 = arith.constant 0 : i32
    return %c0_i32, %arg1 : i32, i32
  }
  func.func @transform_4(%arg0: i32, %arg1: i32, %arg2: i32) -> (i32, i32) {
    %c0_i32 = arith.constant 0 : i32
    %c0_i32_0 = arith.constant 0 : i32
    return %c0_i32, %arg1 : i32, i32
  }
  func.func @transform_5(%arg0: i32, %arg1: i32, %arg2: i32) -> (i32, i32) {
    %c0_i32 = arith.constant 0 : i32
    return %arg0, %arg1 : i32, i32
  }
}

</mosaic_0001>

<llo_original>
// kernel: tpu_custom_call.1
$region0: #{tpu_custom_call.1}
  #allocation0 [shape = 'u32[]', space=smem, size = 0x4, offset = 0x4, fixed_abs, tag = 'smem constant byte address 0x4 - core index']
  #allocation1 [shape = 'u32[144,128]{1,0:T(1,128)}', space=vmem, size = 0x12000, scoped, tag = 'internal scratch']
  #allocation2 [shape = 'f32[16,128]{1,0:T(8,128)}', space=vmem, size = 0x2000, scoped, tag = 'scratch operand']
  #allocation3 [shape = 'f32[16,1]{1,0:T(8,128)}', space=vmem, size = 0x2000, scoped, tag = 'scratch operand']
  %s0 = inlined_call_operand.hbm [shape: f32[16,128], index: 0, kind: input, shape index: {}]
  %s1 = inlined_call_operand.hbm [shape: bf16[128,128], index: 1, kind: input, shape index: {}]
  %s2 = inlined_call_operand.vmem [shape: f32[1,128], index: 2, kind: input, shape index: {}]
  %s3 = inlined_call_operand.vmem [shape: f32[1,128], index: 3, kind: input, shape index: {}]
  %s4 = inlined_call_operand.vmem [shape: f32[1,128], index: 4, kind: input, shape index: {}]
  %s5 = inlined_call_operand.hbm [shape: f32[16,128], index: 5, kind: output, shape index: {}]
  %s6 = sld [smem:[#allocation0]]
  $region46: #{tpu_custom_call.1} parent=0
    _
  %s8 = ssub.s32 1, %s6
  %s9 = scalar_select 0, %s8, %s6
  $region1: #{tpu_custom_call.1} parent=0
    #allocation4 [shape = 'u8[8192]{0}', space=vmem, size = 0x2000, scoped, tag = 'input window, operand 0, single buffered']
    #allocation5 [shape = 's32[1]{0}', space=sflag, size = 0x4, scoped, tag = 'scoped memory for tpu_custom_call.1']
    #allocation6 [shape = 's32[1]{0}', space=sflag, size = 0x4, scoped, tag = 'scoped memory for tpu_custom_call.1']
    #allocation7 [shape = 'u8[32768]{0}', space=vmem, size = 0x8000, scoped, tag = 'input window, operand 1, single buffered']
    #allocation8 [shape = 's32[1]{0}', space=sflag, size = 0x4, scoped, tag = 'scoped memory for tpu_custom_call.1']
    #allocation9 [shape = 'u8[8192]{0}', space=vmem, size = 0x2000, scoped, tag = 'output window, operand 0, single buffered']
    %10 = vsyncpa [#allocation5], 0
    %11 = vsyncpa [#allocation8], 0
    %12 = vsyncpa [#allocation6], 0
    // Predicated region
    $region2: #{tpu_custom_call.1} parent=1 // pred_check
      _
    $region3: #{tpu_custom_call.1} parent=1 // pred_check_branch
      %14 = sbr.rel (0) target = $region5
    $region4: #{tpu_custom_call.1} parent=1 // pred_region
      %s16 = ssub.s32 256, 256
      %17 = vsyncadd [#allocation5], %s16
      %s18 = sshll.u32 [#allocation4], 4
      %s19 = int_to_ptr.vmem [resolvable:$true] %s18
      %24 = dma.hbm_to_vmem [thread:$0]  %s0, 256, %s19, [#allocation5], 128, 128, 8
    $region5: #{tpu_custom_call.1} parent=1 // pred_fallthru
      _
    // Predicated region
    $region6: #{tpu_custom_call.1} parent=1 // pred_check
      _
    $region7: #{tpu_custom_call.1} parent=1 // pred_check_branch
      %26 = sbr.rel (0) target = $region9
    $region8: #{tpu_custom_call.1} parent=1 // pred_region
      %s28 = ssub.s32 1024, 1024
      %29 = vsyncadd [#allocation8], %s28
      %s30 = sshll.u32 [#allocation7], 4
      %s31 = int_to_ptr.vmem [resolvable:$true] %s30
      %36 = dma.hbm_to_vmem [thread:$0]  %s1, 1024, %s31, [#allocation8], 64, 64, 4
    $region9: #{tpu_custom_call.1} parent=1 // pred_fallthru
      _
    // Predicated region
    $region10: #{tpu_custom_call.1} parent=1 // pred_check
      _
    $region11: #{tpu_custom_call.1} parent=1 // pred_check_branch
      %38 = sbr.rel (0) target = $region13
    $region12: #{tpu_custom_call.1} parent=1 // pred_region
      _
    $region13: #{tpu_custom_call.1} parent=1 // pred_fallthru
      _
    // Predicated region
    $region14: #{tpu_custom_call.1} parent=1 // pred_check
      _
    $region15: #{tpu_custom_call.1} parent=1 // pred_check_branch
      %40 = sbr.rel (0) target = $region17
    $region16: #{tpu_custom_call.1} parent=1 // pred_region
      _
    $region17: #{tpu_custom_call.1} parent=1 // pred_fallthru
      _
    // Predicated region
    $region18: #{tpu_custom_call.1} parent=1 // pred_check
      _
    $region19: #{tpu_custom_call.1} parent=1 // pred_check_branch
      %42 = sbr.rel (0) target = $region21
    $region20: #{tpu_custom_call.1} parent=1 // pred_region
      _
    $region21: #{tpu_custom_call.1} parent=1 // pred_fallthru
      _
    // Predicated region
    $region22: #{tpu_custom_call.1} parent=1 // pred_check
      _
    $region23: #{tpu_custom_call.1} parent=1 // pred_check_branch
      %44 = sbr.rel (0) target = $region25
    $region24: #{tpu_custom_call.1} parent=1 // pred_region
      %45 = dma.done [#allocation5], 256
    $region25: #{tpu_custom_call.1} parent=1 // pred_fallthru
      _
    // Predicated region
    $region26: #{tpu_custom_call.1} parent=1 // pred_check
      _
    $region27: #{tpu_custom_call.1} parent=1 // pred_check_branch
      %47 = sbr.rel (0) target = $region29
    $region28: #{tpu_custom_call.1} parent=1 // pred_region
      %48 = dma.done [#allocation8], 1024
    $region29: #{tpu_custom_call.1} parent=1 // pred_fallthru
      _
    %p50 = scmp.eq.s32.totalorder 0, 0
    // Predicated region
    $region30: #{tpu_custom_call.1} parent=1 // pred_check
      %p51 = pneg %p50
    $region31: #{tpu_custom_call.1} parent=1 // pred_check_branch
      %53 = sbr.rel (%p51) target = $region33
    $region32: #{tpu_custom_call.1} parent=1 // pred_region
      %54 = vst [vmem:[#allocation2] sm:$0xff] 0.0
      %55 = vst [vmem:[#allocation2 + $0x8] sm:$0xff] 0.0
      %vm56 = vcmask 7168
      %57 = vst.msk [vmem:[#allocation3] sm:$0xff] %vm56, 0.0
      %58 = vst.msk [vmem:[#allocation3 + $0x8] sm:$0xff] %vm56, 0.0
    $region33: #{tpu_custom_call.1} parent=1 // pred_fallthru
      _
    %v59 = vld [vmem:[#allocation4] sm:$0xff]
    %v60 = vld [vmem:[#allocation4 + $0x8] sm:$0xff]
    %v61 = vld [vmem:[#allocation2] sm:$0xff]
    %v62 = vld [vmem:[#allocation2 + $0x8] sm:$0xff]
    %v63 = vpack.c.bf16 %v60, %v59
    %v64 = vld [vmem:[#allocation7] sm:$0xf]
    %v65 = vld [vmem:[#allocation7 + $0x4] sm:$0xf]
    %v66 = vld [vmem:[#allocation7 + $0x8] sm:$0xf]
    %v67 = vld [vmem:[#allocation7 + $0xc] sm:$0xf]
    %v68 = vld [vmem:[#allocation7 + $0x10] sm:$0xf]
    %v69 = vld [vmem:[#allocation7 + $0x14] sm:$0xf]
    %v70 = vld [vmem:[#allocation7 + $0x18] sm:$0xf]
    %v71 = vld [vmem:[#allocation7 + $0x1c] sm:$0xf]
    %v72 = vld [vmem:[#allocation7 + $0x20] sm:$0xf]
    %v73 = vld [vmem:[#allocation7 + $0x24] sm:$0xf]
    %v74 = vld [vmem:[#allocation7 + $0x28] sm:$0xf]
    %v75 = vld [vmem:[#allocation7 + $0x2c] sm:$0xf]
    %v76 = vld [vmem:[#allocation7 + $0x30] sm:$0xf]
    %v77 = vld [vmem:[#allocation7 + $0x34] sm:$0xf]
    %v78 = vld [vmem:[#allocation7 + $0x38] sm:$0xf]
    %v79 = vld [vmem:[#allocation7 + $0x3c] sm:$0xf]
    %v96 = vunpack.c.l.b16 %v64
    %v97 = vunpack.c.l.b16 %v65
    %v98 = vunpack.c.l.b16 %v66
    %v99 = vunpack.c.l.b16 %v67
    %v100 = vunpack.c.l.b16 %v68
    %v101 = vunpack.c.l.b16 %v69
    %v102 = vunpack.c.l.b16 %v70
    %v103 = vunpack.c.l.b16 %v71
    %v104 = vunpack.c.l.b16 %v72
    %v105 = vunpack.c.l.b16 %v73
    %v106 = vunpack.c.l.b16 %v74
    %v107 = vunpack.c.l.b16 %v75
    %v108 = vunpack.c.l.b16 %v76
    %v109 = vunpack.c.l.b16 %v77
    %v110 = vunpack.c.l.b16 %v78
    %v111 = vunpack.c.l.b16 %v79
    %v112 = vpack.c.b16 %v97, %v96
    %v113 = vpack.c.b16 %v99, %v98
    %v114 = vpack.c.b16 %v101, %v100
    %v115 = vpack.c.b16 %v103, %v102
    %v116 = vpack.c.b16 %v105, %v104
    %v117 = vpack.c.b16 %v107, %v106
    %v118 = vpack.c.b16 %v109, %v108
    %v119 = vpack.c.b16 %v111, %v110
    %128 = vmatprep.subr.bf16.mxu0 0
    %129 = vmatpush1.bf16.msra.mxu0 %v112
    %130 = vmatprep.subr.bf16.mxu0 0
    %131 = vmatpush1.bf16.msra.mxu0 %v113
    %132 = vmatprep.subr.bf16.mxu0 0
    %133 = vmatpush1.bf16.msra.mxu0 %v114
    %134 = vmatprep.subr.bf16.mxu0 0
    %135 = vmatpush1.bf16.msra.mxu0 %v115
    %136 = vmatprep.subr.bf16.mxu0 0
    %137 = vmatpush1.bf16.msra.mxu0 %v116
    %138 = vmatprep.subr.bf16.mxu0 0
    %139 = vmatpush1.bf16.msra.mxu0 %v117
    %140 = vmatprep.subr.bf16.mxu0 0
    %141 = vmatpush1.bf16.msra.mxu0 %v118
    %142 = vmatprep.subr.bf16.mxu0 0
    %143 = vmatpush1.bf16.msra.mxu0 %v119
    %144 = vmatprep.subr.bf16.mxu0 0
    %145 = vmatpush1.bf16.msra.mxu0 0
    %146 = vmatprep.subr.bf16.mxu0 0
    %147 = vmatpush1.bf16.msra.mxu0 0
    %148 = vmatprep.subr.bf16.mxu0 0
    %149 = vmatpush1.bf16.msra.mxu0 0
    %150 = vmatprep.subr.bf16.mxu0 0
    %151 = vmatpush1.bf16.msra.mxu0 0
    %152 = vmatprep.subr.bf16.mxu0 0
    %153 = vmatpush1.bf16.msra.mxu0 0
    %154 = vmatprep.subr.bf16.mxu0 0
    %155 = vmatpush1.bf16.msra.mxu0 0
    %156 = vmatprep.subr.bf16.mxu0 0
    %157 = vmatpush1.bf16.msra.mxu0 0
    %158 = vmatprep.subr.bf16.mxu0 0
    %159 = vmatpush1.bf16.msra.mxu0 0
    %160 = vmatprep.mubr.bf16.mxu0 0
    %161 = vmatmul.mubr.bf16.gmra.mrb[0].mxu0 %v63
    %v162 = vpop.f32.mrb[0].mxu0
    %v163 = vadd.f32 0.0, %v162
    %v164 = vpop.f32.mrb[0].mxu0
    %v165 = vpop.f32.mrb[0].mxu0
    %v166 = vadd.f32 0.0, %v165
    %v167 = vpop.f32.mrb[0].mxu0
    %168 = vdwg.mxu0
    %v169 = vadd.f32 %v61, %v163
    %v170 = vadd.f32 %v62, %v166
    %171 = vst [vmem:[#allocation2] sm:$0xff] %v169
    %172 = vst [vmem:[#allocation2 + $0x8] sm:$0xff] %v170
    %v173 = vld [vmem:[#allocation3] sm:$0xff]
    %v174 = vld [vmem:[#allocation3 + $0x8] sm:$0xff]
    %175 = vadd.xlane.f32.xlu0 %v59
    %v176 = vpop.xlane.xlu0 %175
    %177 = vadd.xlane.f32.xlu0 %v60
    %v178 = vpop.xlane.xlu0 %177
    %v179 = vadd.f32 %v173, %v176
    %v180 = vadd.f32 %v174, %v178
    %vm181 = vcmask 7168
    %182 = vst.msk [vmem:[#allocation3] sm:$0xff] %vm181, %v179
    %183 = vst.msk [vmem:[#allocation3 + $0x8] sm:$0xff] %vm181, %v180
    // Predicated region
    $region34: #{tpu_custom_call.1} parent=1 // pred_check
      %p184 = pneg %p50
    $region35: #{tpu_custom_call.1} parent=1 // pred_check_branch
      %186 = sbr.rel (%p184) target = $region37
    $region36: #{tpu_custom_call.1} parent=1 // pred_region
      %v187 = vld [vmem:[#allocation2] sm:$0xff]
      %v188 = vld [vmem:[#allocation2 + $0x8] sm:$0xff]
      %v189 = vld [vmem:[%s2] sm:$0x1]
      %v191 = vlaneseq
      %v192 = vshrl.u32 %v191, 7
      %v193 = vsub.s32 0, %v192
      %v194 = vrot.slane %v189, %v193
      %v196 = vmul.f32 %v187, %v194
      %v197 = vmul.f32 %v188, %v194
      %v198 = vld [vmem:[#allocation3] sm:$0xff]
      %v199 = vld [vmem:[#allocation3 + $0x8] sm:$0xff]
      %v200 = vld [vmem:[%s3] sm:$0x1]
      %202 = vset.pattern.permute.xlu0 0
      %203 = vperm.xlu0 %202, %v198
      %v204 = vpop.permute.xlu0 %203
      %207 = vset.pattern.permute.xlu0 0
      %208 = vperm.xlu0 %207, %v199
      %v209 = vpop.permute.xlu0 %208
      %v212 = vlaneseq
      %v213 = vshrl.u32 %v212, 7
      %v214 = vsub.s32 0, %v213
      %v215 = vrot.slane %v200, %v214
      %v217 = vmul.f32 %v204, %v215
      %v218 = vmul.f32 %v209, %v215
      %v219 = vadd.f32 %v196, %v217
      %v220 = vadd.f32 %v197, %v218
      %v221 = vld [vmem:[%s4] sm:$0x1]
      %v223 = vlaneseq
      %v224 = vshrl.u32 %v223, 7
      %v225 = vsub.s32 0, %v224
      %v226 = vrot.slane %v221, %v225
      %v228 = vadd.f32 %v219, %v226
      %v229 = vadd.f32 %v220, %v226
      %230 = vst [vmem:[#allocation9] sm:$0xff] %v228
      %231 = vst [vmem:[#allocation9 + $0x8] sm:$0xff] %v229
    $region37: #{tpu_custom_call.1} parent=1 // pred_fallthru
      _
    // Predicated region
    $region38: #{tpu_custom_call.1} parent=1 // pred_check
      _
    $region39: #{tpu_custom_call.1} parent=1 // pred_check_branch
      %233 = sbr.rel (0) target = $region41
    $region40: #{tpu_custom_call.1} parent=1 // pred_region
      %s235 = ssub.s32 256, 256
      %236 = vsyncadd [#allocation6], %s235
      %s237 = sshll.u32 [#allocation9], 4
      %s238 = int_to_ptr.vmem [resolvable:$true] %s237
      %243 = dma.vmem_to_hbm [thread:$0]  %s238, 256, %s5, [#allocation6], 128, 128, 8
    $region41: #{tpu_custom_call.1} parent=1 // pred_fallthru
      _
    // Predicated region
    $region42: #{tpu_custom_call.1} parent=1 // pred_check
      _
    $region43: #{tpu_custom_call.1} parent=1 // pred_check_branch
      %245 = sbr.rel (0) target = $region45
    $region44: #{tpu_custom_call.1} parent=1 // pred_region
      %246 = dma.done [#allocation6], 256
    $region45: #{tpu_custom_call.1} parent=1 // pred_fallthru
      _
    %247 = vsyncpa [#allocation5], 1
    %248 = vsyncpa [#allocation8], 1
    %249 = vsyncpa [#allocation6], 1

</llo_original>
